<compile_context>
chip_gen: v6e
topology: v6e:2x2x1
jax: 0.10.0
libtpu: 0.0.40
codegen_flags: <defaults>
</compile_context>

<pallas_src>
import jax
import jax.numpy as jnp
from jax.experimental import pallas as pl
from jax.experimental.pallas import tpu as pltpu


def _build_conv_matrix(wc, H, Hp):
    """Dense banded matrix M so that the (K,1) 'same' conv is M @ x_cols.

    wc : (OC, C, K) conv weight (width-1 kernel dim squeezed).
    M  : (H*OC, C*Hp), rows ordered (h, oc), cols ordered (c, hp);
         M[h*OC + oc, c*Hp + hp] = wc[oc, c, hp - h] if 0 <= hp - h < K else 0.
    """
    OC, C, K = wc.shape
    h = jnp.arange(H)[:, None]            # (H, 1)
    hp = jnp.arange(Hp)[None, :]          # (1, Hp)
    dk = hp - h                           # (H, Hp)
    valid = (dk >= 0) & (dk < K)
    dkc = jnp.clip(dk, 0, K - 1)
    wsel = wc[:, :, dkc]                                  # (OC, C, H, Hp)
    wsel = jnp.where(valid[None, None, :, :], wsel, 0.0)
    return jnp.transpose(wsel, (2, 0, 1, 3)).reshape(H * OC, C * Hp)


def cnnrec_forward(x, conv_w, conv_b, lin_w, lin_b, pool_kernel, tn_target=1024):
    """x: [B,C,H,W]; conv_w: [OC,C,K,1]; conv_b: [OC]; lin_w: [RF*PH, OC*PH]; lin_b: [RF*PH].

    Returns (pool_out [B,OC,PH,W], rec_out [B,RF*PH,W]) matching the torch module (eval mode).
    """
    B, C, H, W = x.shape
    OC, C2, K, KW = conv_w.shape
    assert C2 == C and KW == 1
    P = pool_kernel
    PH = H // P
    OUT, IN = lin_w.shape
    assert IN == OC * PH

    # ZeroPad2d padding exactly as the torch module computes it.
    pad_top = K // 2 + (K % 2) - 1
    pad_bot = K // 2
    Hp = H + pad_top + pad_bot            # = H + K - 1  ->  'same' output height

    f32 = jnp.float32
    # ---- wrapper-side layout plumbing (plain XLA, no FLOPs) ----
    x_pad = jnp.pad(x.astype(f32), ((0, 0), (0, 0), (pad_top, pad_bot), (0, 0)))
    # rows = (c, hp), lanes (tokens) = (b, w)
    xt = jnp.transpose(x_pad, (1, 2, 0, 3)).reshape(C * Hp, B * W)
    N = B * W

    wconv = _build_conv_matrix(conv_w[..., 0].astype(f32), H, Hp)        # (H*OC, C*Hp)
    bconv = jnp.tile(conv_b.astype(f32), H).reshape(H * OC, 1)           # bias per (h, oc) row
    # Linear weight columns permuted from torch's (oc, ph) order to the kernel's (ph, oc) order.
    wlin = jnp.transpose(lin_w.astype(f32).reshape(OUT, OC, PH), (0, 2, 1)).reshape(OUT, PH * OC)
    blin = lin_b.astype(f32).reshape(OUT, 1)

    # Token blocking: many batch elements per grid step, lane-dense blocks.
    if N <= tn_target:
        TN, N_pad = N, N                  # single full-extent block
    else:
        TN = tn_target                    # multiple of 128 -> unmasked lane-dense stores
        N_pad = ((N + TN - 1) // TN) * TN
    if N_pad != N:
        xt = jnp.pad(xt, ((0, 0), (0, N_pad - N)))

    def kernel(x_ref, wc_ref, bc_ref, wl_ref, bl_ref, pool_ref, rec_ref):
        xb = x_ref[...]                                                   # (C*Hp, TN)
        # Conv (+bias) as one MXU matmul, tanh on the EUP.
        act = jnp.tanh(
            jnp.dot(wc_ref[...], xb, preferred_element_type=jnp.float32)
            + bc_ref[...])                                                # (H*OC, TN)
        # Max-pool along H (window P, stride P). Rows are ordered (h, oc),
        # so each pooling window is a contiguous P*OC-row slab.
        parts = []
        for ph in range(PH):
            blk = act[ph * P * OC:(ph + 1) * P * OC, :]
            m = blk[0:OC, :]
            for p in range(1, P):
                m = jnp.maximum(m, blk[p * OC:(p + 1) * OC, :])
            parts.append(m)
        pooled = parts[0] if PH == 1 else jnp.concatenate(parts, axis=0)  # (PH*OC, TN)
        pool_ref[...] = pooled.astype(pool_ref.dtype)
        # rec: Linear (+bias) + tanh; Dropout == identity at inference.
        rec = jnp.tanh(
            jnp.dot(wl_ref[...], pooled, preferred_element_type=jnp.float32)
            + bl_ref[...])                                                # (OUT, TN)
        rec_ref[...] = rec.astype(rec_ref.dtype)

    grid = (N_pad // TN,)
    pool_t, rec_t = pl.pallas_call(
        kernel,
        out_shape=(jax.ShapeDtypeStruct((PH * OC, N_pad), f32),
                   jax.ShapeDtypeStruct((OUT, N_pad), f32)),
        grid_spec=pltpu.PrefetchScalarGridSpec(
            num_scalar_prefetch=0,
            grid=grid,
            in_specs=[
                pl.BlockSpec((C * Hp, TN), lambda n: (0, n)),          # activations (blocked on tokens)
                pl.BlockSpec((H * OC, C * Hp), lambda n: (0, 0)),      # banded conv matrix (resident)
                pl.BlockSpec((H * OC, 1), lambda n: (0, 0)),           # conv bias
                pl.BlockSpec((OUT, PH * OC), lambda n: (0, 0)),        # linear weight (permuted)
                pl.BlockSpec((OUT, 1), lambda n: (0, 0)),              # linear bias
            ],
            out_specs=[
                pl.BlockSpec((PH * OC, TN), lambda n: (0, n)),
                pl.BlockSpec((OUT, TN), lambda n: (0, n)),
            ],
        ),
        compiler_params=pltpu.CompilerParams(
            dimension_semantics=("parallel",)),
    )(xt, wconv, bconv, wlin, blin)

    # Back to the torch output layouts (pure index plumbing).
    pool_out = pool_t[:, :N].reshape(PH, OC, B, W).transpose(2, 1, 0, 3)   # [B, OC, PH, W]
    rec_out = rec_t[:, :N].reshape(OUT, B, W).transpose(1, 0, 2)           # [B, RF*PH, W]
    return pool_out, rec_out


def cnnrec_ref(x, conv_w, conv_b, lin_w, lin_b, pool_kernel):
    """Independent pure-JAX reference of the torch forward (eval mode)."""
    B, C, H, W = x.shape
    OC, _, K, _ = conv_w.shape
    P = pool_kernel
    pad_top = K // 2 + (K % 2) - 1
    pad_bot = K // 2
    con = jax.lax.conv_general_dilated(
        x, conv_w, window_strides=(1, 1),
        padding=((pad_top, pad_bot), (0, 0)),
        dimension_numbers=("NCHW", "OIHW", "NCHW"))
    con = jnp.tanh(con + conv_b[None, :, None, None])
    PH = H // P
    pool = con[:, :, :PH * P, :].reshape(B, OC, PH, P, W).max(axis=3)
    rec_x = jnp.transpose(pool.reshape(B, OC * PH, W), (0, 2, 1))
    rec = jnp.tanh(rec_x @ lin_w.T + lin_b)           # Dropout == identity (eval)
    rec_out = jnp.transpose(rec, (0, 2, 1))
    return pool, rec_out


if __name__ == "__main__":
    key = jax.random.PRNGKey(0)
    kx, kw, kb, klw, klb = jax.random.split(key, 5)

    # Small shapes consistent with the module: x [B, C, H, W]
    B, C, H, W = 2, 1, 16, 16            # batch, in_channels, feat_nums, embed_dim
    OC, K, P, RF = 4, 3, 2, 2            # out_channels, con_kernel, pool_kernel, rec_feat_map
    PH = H // P

    x = jax.random.normal(kx, (B, C, H, W), jnp.float32)
    conv_w = 0.5 * jax.random.normal(kw, (OC, C, K, 1), jnp.float32)
    conv_b = 0.1 * jax.random.normal(kb, (OC,), jnp.float32)
    lin_w = 0.2 * jax.random.normal(klw, (RF * PH, OC * PH), jnp.float32)
    lin_b = 0.1 * jax.random.normal(klb, (RF * PH,), jnp.float32)

    pool_out, rec_out = cnnrec_forward(x, conv_w, conv_b, lin_w, lin_b, pool_kernel=P)
    pool_out, rec_out = jax.block_until_ready((pool_out, rec_out))

    pool_ref, rec_ref = cnnrec_ref(x, conv_w, conv_b, lin_w, lin_b, pool_kernel=P)

    assert pool_out.shape == (B, OC, PH, W), pool_out.shape
    assert rec_out.shape == (B, RF * PH, W), rec_out.shape
    assert jnp.allclose(pool_out, pool_ref, atol=1e-4, rtol=1e-4), "pool_out mismatch vs reference"
    assert jnp.allclose(rec_out, rec_ref, atol=1e-4, rtol=1e-4), "rec_out mismatch vs reference"

    print("KERNEL_OK")
</pallas_src>

<mosaic_0001>
module attributes {stable_mosaic.version = 11 : i64} {
  func.func @kernel(%arg0: i32, %arg1: memref<18x32xf32, #tpu.memory_space<vmem>>, %arg2: memref<64x18xf32, #tpu.memory_space<vmem>>, %arg3: memref<64x1xf32, #tpu.memory_space<vmem>>, %arg4: memref<16x32xf32, #tpu.memory_space<vmem>>, %arg5: memref<16x1xf32, #tpu.memory_space<vmem>>, %arg6: memref<32x32xf32, #tpu.memory_space<vmem>>, %arg7: memref<16x32xf32, #tpu.memory_space<vmem>>) attributes {dimension_semantics = [#tpu.dimension_semantics<parallel>], iteration_bounds = array<i64: 1>, scalar_prefetch = 0 : i64, scratch_operands = 0 : i64, tpu.core_type = #tpu.core_type<tc>, window_params = [{transform_indices = @transform_0, window_bounds = array<i64: 18, 32>}, {pipeline_mode = #tpu.pipeline_mode<synchronous>, transform_indices = @transform_1, window_bounds = array<i64: 64, 18>}, {pipeline_mode = #tpu.pipeline_mode<synchronous>, transform_indices = @transform_2, window_bounds = array<i64: 64, 1>}, {pipeline_mode = #tpu.pipeline_mode<synchronous>, transform_indices = @transform_3, window_bounds = array<i64: 16, 32>}, {pipeline_mode = #tpu.pipeline_mode<synchronous>, transform_indices = @transform_4, window_bounds = array<i64: 16, 1>}, {transform_indices = @transform_5, window_bounds = array<i64: 32, 32>}, {transform_indices = @transform_6, window_bounds = array<i64: 16, 32>}]} {
    %c0 = arith.constant 0 : index
    %c0_0 = arith.constant 0 : index
    %0 = vector.load %arg1[%c0, %c0_0] : memref<18x32xf32, #tpu.memory_space<vmem>>, vector<18x32xf32>
    %c0_1 = arith.constant 0 : index
    %c0_2 = arith.constant 0 : index
    %1 = vector.load %arg2[%c0_1, %c0_2] : memref<64x18xf32, #tpu.memory_space<vmem>>, vector<64x18xf32>
    %cst = arith.constant dense<0.000000e+00> : vector<64x32xf32>
    %2 = tpu.matmul %1, %0, %cst {dimension_numbers = #tpu.dot_dimension_numbers<[1], [0], [0], [1], [0, 0, 1, 1], [], []>} : vector<64x18xf32>, vector<18x32xf32>, vector<64x32xf32> -> vector<64x32xf32>
    %c0_3 = arith.constant 0 : index
    %c0_4 = arith.constant 0 : index
    %3 = vector.load %arg3[%c0_3, %c0_4] : memref<64x1xf32, #tpu.memory_space<vmem>>, vector<64x1xf32>
    %4 = vector.broadcast %3 : vector<64x1xf32> to vector<64x32xf32>
    %5 = arith.addf %2, %4 : vector<64x32xf32>
    %6 = math.tanh %5 : vector<64x32xf32>
    %7 = vector.extract_strided_slice %6 {offsets = [0, 0], sizes = [8, 32], strides = [1, 1]} : vector<64x32xf32> to vector<8x32xf32>
    %8 = vector.extract_strided_slice %7 {offsets = [0, 0], sizes = [4, 32], strides = [1, 1]} : vector<8x32xf32> to vector<4x32xf32>
    %9 = vector.extract_strided_slice %7 {offsets = [4, 0], sizes = [4, 32], strides = [1, 1]} : vector<8x32xf32> to vector<4x32xf32>
    %10 = arith.maximumf %8, %9 : vector<4x32xf32>
    %11 = vector.extract_strided_slice %6 {offsets = [8, 0], sizes = [8, 32], strides = [1, 1]} : vector<64x32xf32> to vector<8x32xf32>
    %12 = vector.extract_strided_slice %11 {offsets = [0, 0], sizes = [4, 32], strides = [1, 1]} : vector<8x32xf32> to vector<4x32xf32>
    %13 = vector.extract_strided_slice %11 {offsets = [4, 0], sizes = [4, 32], strides = [1, 1]} : vector<8x32xf32> to vector<4x32xf32>
    %14 = arith.maximumf %12, %13 : vector<4x32xf32>
    %15 = vector.extract_strided_slice %6 {offsets = [16, 0], sizes = [8, 32], strides = [1, 1]} : vector<64x32xf32> to vector<8x32xf32>
    %16 = vector.extract_strided_slice %15 {offsets = [0, 0], sizes = [4, 32], strides = [1, 1]} : vector<8x32xf32> to vector<4x32xf32>
    %17 = vector.extract_strided_slice %15 {offsets = [4, 0], sizes = [4, 32], strides = [1, 1]} : vector<8x32xf32> to vector<4x32xf32>
    %18 = arith.maximumf %16, %17 : vector<4x32xf32>
    %19 = vector.extract_strided_slice %6 {offsets = [24, 0], sizes = [8, 32], strides = [1, 1]} : vector<64x32xf32> to vector<8x32xf32>
    %20 = vector.extract_strided_slice %19 {offsets = [0, 0], sizes = [4, 32], strides = [1, 1]} : vector<8x32xf32> to vector<4x32xf32>
    %21 = vector.extract_strided_slice %19 {offsets = [4, 0], sizes = [4, 32], strides = [1, 1]} : vector<8x32xf32> to vector<4x32xf32>
    %22 = arith.maximumf %20, %21 : vector<4x32xf32>
    %23 = vector.extract_strided_slice %6 {offsets = [32, 0], sizes = [8, 32], strides = [1, 1]} : vector<64x32xf32> to vector<8x32xf32>
    %24 = vector.extract_strided_slice %23 {offsets = [0, 0], sizes = [4, 32], strides = [1, 1]} : vector<8x32xf32> to vector<4x32xf32>
    %25 = vector.extract_strided_slice %23 {offsets = [4, 0], sizes = [4, 32], strides = [1, 1]} : vector<8x32xf32> to vector<4x32xf32>
    %26 = arith.maximumf %24, %25 : vector<4x32xf32>
    %27 = vector.extract_strided_slice %6 {offsets = [40, 0], sizes = [8, 32], strides = [1, 1]} : vector<64x32xf32> to vector<8x32xf32>
    %28 = vector.extract_strided_slice %27 {offsets = [0, 0], sizes = [4, 32], strides = [1, 1]} : vector<8x32xf32> to vector<4x32xf32>
    %29 = vector.extract_strided_slice %27 {offsets = [4, 0], sizes = [4, 32], strides = [1, 1]} : vector<8x32xf32> to vector<4x32xf32>
    %30 = arith.maximumf %28, %29 : vector<4x32xf32>
    %31 = vector.extract_strided_slice %6 {offsets = [48, 0], sizes = [8, 32], strides = [1, 1]} : vector<64x32xf32> to vector<8x32xf32>
    %32 = vector.extract_strided_slice %31 {offsets = [0, 0], sizes = [4, 32], strides = [1, 1]} : vector<8x32xf32> to vector<4x32xf32>
    %33 = vector.extract_strided_slice %31 {offsets = [4, 0], sizes = [4, 32], strides = [1, 1]} : vector<8x32xf32> to vector<4x32xf32>
    %34 = arith.maximumf %32, %33 : vector<4x32xf32>
    %35 = vector.extract_strided_slice %6 {offsets = [56, 0], sizes = [8, 32], strides = [1, 1]} : vector<64x32xf32> to vector<8x32xf32>
    %36 = vector.extract_strided_slice %35 {offsets = [0, 0], sizes = [4, 32], strides = [1, 1]} : vector<8x32xf32> to vector<4x32xf32>
    %37 = vector.extract_strided_slice %35 {offsets = [4, 0], sizes = [4, 32], strides = [1, 1]} : vector<8x32xf32> to vector<4x32xf32>
    %38 = arith.maximumf %36, %37 : vector<4x32xf32>
    %39 = tpu.concatenate %10, %14, %18, %22, %26, %30, %34, %38 in 0 : vector<4x32xf32>, vector<4x32xf32>, vector<4x32xf32>, vector<4x32xf32>, vector<4x32xf32>, vector<4x32xf32>, vector<4x32xf32>, vector<4x32xf32> -> vector<32x32xf32>
    %c0_5 = arith.constant 0 : index
    %c0_6 = arith.constant 0 : index
    %40 = vector.load %arg6[%c0_5, %c0_6] : memref<32x32xf32, #tpu.memory_space<vmem>>, vector<32x32xf32>
    tpu.vector_store %arg6[%c0_5, %c0_6], %39 {strides = array<i32>} : memref<32x32xf32, #tpu.memory_space<vmem>>, vector<32x32xf32>,
    %c0_7 = arith.constant 0 : index
    %c0_8 = arith.constant 0 : index
    %41 = vector.load %arg4[%c0_7, %c0_8] : memref<16x32xf32, #tpu.memory_space<vmem>>, vector<16x32xf32>
    %cst_9 = arith.constant dense<0.000000e+00> : vector<16x32xf32>
    %42 = tpu.matmul %41, %39, %cst_9 {dimension_numbers = #tpu.dot_dimension_numbers<[1], [0], [0], [1], [0, 0, 1, 1], [], []>} : vector<16x32xf32>, vector<32x32xf32>, vector<16x32xf32> -> vector<16x32xf32>
    %c0_10 = arith.constant 0 : index
    %c0_11 = arith.constant 0 : index
    %43 = vector.load %arg5[%c0_10, %c0_11] : memref<16x1xf32, #tpu.memory_space<vmem>>, vector<16x1xf32>
    %44 = vector.broadcast %43 : vector<16x1xf32> to vector<16x32xf32>
    %45 = arith.addf %42, %44 : vector<16x32xf32>
    %46 = math.tanh %45 : vector<16x32xf32>
    %c0_12 = arith.constant 0 : index
    %c0_13 = arith.constant 0 : index
    %47 = vector.load %arg7[%c0_12, %c0_13] : memref<16x32xf32, #tpu.memory_space<vmem>>, vector<16x32xf32>
    tpu.vector_store %arg7[%c0_12, %c0_13], %46 {strides = array<i32>} : memref<16x32xf32, #tpu.memory_space<vmem>>, vector<16x32xf32>,
    return
  }
  func.func @transform_0(%arg0: i32) -> (i32, i32) {
    %c0_i32 = arith.constant 0 : i32
    %c0_i32_0 = arith.constant 0 : i32
    return %c0_i32, %arg0 : i32, i32
  }
  func.func @transform_1(%arg0: i32) -> (i32, i32) {
    %c0_i32 = arith.constant 0 : i32
    %c0_i32_0 = arith.constant 0 : i32
    %c0_i32_1 = arith.constant 0 : i32
    return %c0_i32, %c0_i32_0 : i32, i32
  }
  func.func @transform_2(%arg0: i32) -> (i32, i32) {
    %c0_i32 = arith.constant 0 : i32
    %c0_i32_0 = arith.constant 0 : i32
    %c0_i32_1 = arith.constant 0 : i32
    return %c0_i32, %c0_i32_0 : i32, i32
  }
  func.func @transform_3(%arg0: i32) -> (i32, i32) {
    %c0_i32 = arith.constant 0 : i32
    %c0_i32_0 = arith.constant 0 : i32
    %c0_i32_1 = arith.constant 0 : i32
    return %c0_i32, %c0_i32_0 : i32, i32
  }
  func.func @transform_4(%arg0: i32) -> (i32, i32) {
    %c0_i32 = arith.constant 0 : i32
    %c0_i32_0 = arith.constant 0 : i32
    %c0_i32_1 = arith.constant 0 : i32
    return %c0_i32, %c0_i32_0 : i32, i32
  }
  func.func @transform_5(%arg0: i32) -> (i32, i32) {
    %c0_i32 = arith.constant 0 : i32
    %c0_i32_0 = arith.constant 0 : i32
    return %c0_i32, %arg0 : i32, i32
  }
  func.func @transform_6(%arg0: i32) -> (i32, i32) {
    %c0_i32 = arith.constant 0 : i32
    %c0_i32_0 = arith.constant 0 : i32
    return %c0_i32, %arg0 : i32, i32
  }
}

</mosaic_0001>

<llo_original>
// kernel: tpu_custom_call.1
$region0: #{tpu_custom_call.1}
  #allocation0 [shape = 'u32[]', space=smem, size = 0x4, offset = 0x4, fixed_abs, tag = 'smem constant byte address 0x4 - core index']
  #allocation1 [shape = 'u32[144,128]{1,0:T(1,128)}', space=vmem, size = 0x12000, scoped, tag = 'internal scratch']
  %s0 = inlined_call_operand.vmem [shape: f32[18,32], index: 0, kind: input, shape index: {}]
  %s1 = inlined_call_operand.vmem [shape: f32[64,18], index: 1, kind: input, shape index: {}]
  %s2 = inlined_call_operand.vmem [shape: f32[64,1], index: 2, kind: input, shape index: {}]
  %s3 = inlined_call_operand.vmem [shape: f32[16,32], index: 3, kind: input, shape index: {}]
  %s4 = inlined_call_operand.vmem [shape: f32[16,1], index: 4, kind: input, shape index: {}]
  %s5 = inlined_call_operand.hbm [shape: f32[32,32], index: 5, kind: output, shape index: {0}]
  %s6 = inlined_call_operand.hbm [shape: f32[16,32], index: 6, kind: output, shape index: {1}]
  %7 = xla_tuple %s5, %s6
  %s8 = sld [smem:[#allocation0]]
  $region38: #{tpu_custom_call.1} parent=0
    _
  %s10 = ssub.s32 1, %s8
  %s11 = scalar_select 0, %s10, %s8
  $region1: #{tpu_custom_call.1} parent=0
    #allocation2 [shape = 'u8[16384]{0}', space=vmem, size = 0x4000, scoped, tag = 'output window, operand 0, single buffered']
    #allocation3 [shape = 's32[1]{0}', space=sflag, size = 0x4, scoped, tag = 'scoped memory for tpu_custom_call.1']
    #allocation4 [shape = 'u8[8192]{0}', space=vmem, size = 0x2000, scoped, tag = 'output window, operand 1, single buffered']
    #allocation5 [shape = 's32[1]{0}', space=sflag, size = 0x4, scoped, tag = 'scoped memory for tpu_custom_call.1']
    %12 = vsyncpa [#allocation3], 0
    %13 = vsyncpa [#allocation5], 0
    // Predicated region
    $region2: #{tpu_custom_call.1} parent=1 // pred_check
      _
    $region3: #{tpu_custom_call.1} parent=1 // pred_check_branch
      %15 = sbr.rel (0) target = $region5
    $region4: #{tpu_custom_call.1} parent=1 // pred_region
      _
    $region5: #{tpu_custom_call.1} parent=1 // pred_fallthru
      _
    // Predicated region
    $region6: #{tpu_custom_call.1} parent=1 // pred_check
      _
    $region7: #{tpu_custom_call.1} parent=1 // pred_check_branch
      %17 = sbr.rel (0) target = $region9
    $region8: #{tpu_custom_call.1} parent=1 // pred_region
      _
    $region9: #{tpu_custom_call.1} parent=1 // pred_fallthru
      _
    // Predicated region
    $region10: #{tpu_custom_call.1} parent=1 // pred_check
      _
    $region11: #{tpu_custom_call.1} parent=1 // pred_check_branch
      %19 = sbr.rel (0) target = $region13
    $region12: #{tpu_custom_call.1} parent=1 // pred_region
      _
    $region13: #{tpu_custom_call.1} parent=1 // pred_fallthru
      _
    // Predicated region
    $region14: #{tpu_custom_call.1} parent=1 // pred_check
      _
    $region15: #{tpu_custom_call.1} parent=1 // pred_check_branch
      %21 = sbr.rel (0) target = $region17
    $region16: #{tpu_custom_call.1} parent=1 // pred_region
      _
    $region17: #{tpu_custom_call.1} parent=1 // pred_fallthru
      _
    // Predicated region
    $region18: #{tpu_custom_call.1} parent=1 // pred_check
      _
    $region19: #{tpu_custom_call.1} parent=1 // pred_check_branch
      %23 = sbr.rel (0) target = $region21
    $region20: #{tpu_custom_call.1} parent=1 // pred_region
      _
    $region21: #{tpu_custom_call.1} parent=1 // pred_fallthru
      _
    %v24 = vld [vmem:[%s0] sm:$0xff]
    %v25 = vld [vmem:[%s0 + $0x8] sm:$0xff]
    %v26 = vld [vmem:[%s0 + $0x10] sm:$0x3]
    %v27 = vld [vmem:[%s1] sm:$0xff]
    %v28 = vld [vmem:[%s1 + $0x8] sm:$0xff]
    %v29 = vld [vmem:[%s1 + $0x10] sm:$0xff]
    %v30 = vld [vmem:[%s1 + $0x18] sm:$0xff]
    %v31 = vld [vmem:[%s1 + $0x20] sm:$0xff]
    %v32 = vld [vmem:[%s1 + $0x28] sm:$0xff]
    %v33 = vld [vmem:[%s1 + $0x30] sm:$0xff]
    %v34 = vld [vmem:[%s1 + $0x38] sm:$0xff]
    %v35 = vld [vmem:[%s2] sm:$0xff]
    %v36 = vld [vmem:[%s2 + $0x8] sm:$0xff]
    %v37 = vld [vmem:[%s2 + $0x10] sm:$0xff]
    %v38 = vld [vmem:[%s2 + $0x18] sm:$0xff]
    %v39 = vld [vmem:[%s2 + $0x20] sm:$0xff]
    %v40 = vld [vmem:[%s2 + $0x28] sm:$0xff]
    %v41 = vld [vmem:[%s2 + $0x30] sm:$0xff]
    %v42 = vld [vmem:[%s2 + $0x38] sm:$0xff]
    %44 = vset.pattern.permute.xlu0 0
    %45 = vperm.xlu0 %44, %v35
    %v46 = vpop.permute.xlu0 %45
    %49 = vset.pattern.permute.xlu0 0
    %50 = vperm.xlu0 %49, %v36
    %v51 = vpop.permute.xlu0 %50
    %54 = vset.pattern.permute.xlu0 0
    %55 = vperm.xlu0 %54, %v37
    %v56 = vpop.permute.xlu0 %55
    %59 = vset.pattern.permute.xlu0 0
    %60 = vperm.xlu0 %59, %v38
    %v61 = vpop.permute.xlu0 %60
    %64 = vset.pattern.permute.xlu0 0
    %65 = vperm.xlu0 %64, %v39
    %v66 = vpop.permute.xlu0 %65
    %69 = vset.pattern.permute.xlu0 0
    %70 = vperm.xlu0 %69, %v40
    %v71 = vpop.permute.xlu0 %70
    %74 = vset.pattern.permute.xlu0 0
    %75 = vperm.xlu0 %74, %v41
    %v76 = vpop.permute.xlu0 %75
    %79 = vset.pattern.permute.xlu0 0
    %80 = vperm.xlu0 %79, %v42
    %v81 = vpop.permute.xlu0 %80
    %vm83 = vcmask 146432
    %v85 = vsel %vm83, %v27, 0
    %v88 = vsel %vm83, %v28, 0
    %v91 = vsel %vm83, %v29, 0
    %v94 = vsel %vm83, %v30, 0
    %v97 = vsel %vm83, %v31, 0
    %v100 = vsel %vm83, %v32, 0
    %v103 = vsel %vm83, %v33, 0
    %v106 = vsel %vm83, %v34, 0
    %vm108 = vcmask 1041408
    %v110 = vsel %vm108, %v26, 0
    %112 = vmatprep.subr.mxu0 0.0
    %113 = vmatpush1.msra.mxu0 0.0
    %114 = vmatprep.subr.mxu0 0.0
    %115 = vmatpush1.msra.mxu0 0.0
    %116 = vmatprep.subr.mxu0 0.0
    %117 = vmatpush1.msra.mxu0 0.0
    %118 = vmatprep.subr.mxu0 0.0
    %119 = vmatpush1.msra.mxu0 0.0
    %120 = vmatprep.subr.mxu0 0.0
    %121 = vmatpush1.msra.mxu0 0.0
    %122 = vmatprep.subr.mxu0 0.0
    %123 = vmatpush1.msra.mxu0 0.0
    %124 = vmatprep.subr.mxu0 0.0
    %125 = vmatpush1.msra.mxu0 0.0
    %126 = vmatprep.subr.mxu0 0.0
    %127 = vmatpush1.msra.mxu0 0.0
    %128 = vmatprep.subr.mxu0 0.0
    %129 = vmatpush1.msra.mxu0 0.0
    %130 = vmatprep.subr.mxu0 0.0
    %131 = vmatpush1.msra.mxu0 0.0
    %132 = vmatprep.subr.mxu0 0.0
    %133 = vmatpush1.msra.mxu0 0.0
    %134 = vmatprep.subr.mxu0 0.0
    %135 = vmatpush1.msra.mxu0 0.0
    %136 = vmatprep.subr.mxu0 0.0
    %137 = vmatpush1.msra.mxu0 0.0
    %138 = vmatprep.subr.mxu0 0.0
    %139 = vmatpush1.msra.mxu0 %v110
    %140 = vmatprep.subr.mxu0 0.0
    %141 = vmatpush1.msra.mxu0 %v25
    %142 = vmatprep.subr.mxu0 0.0
    %143 = vmatpush1.msra.mxu0 %v24
    %144 = vmatprep.subr.mxu0 0.0
    %145 = vmatpush2.msra.mxu0 0.0
    %146 = vmatprep.subr.mxu0 0.0
    %147 = vmatpush2.msra.mxu0 0.0
    %148 = vmatprep.subr.mxu0 0.0
    %149 = vmatpush2.msra.mxu0 0.0
    %150 = vmatprep.subr.mxu0 0.0
    %151 = vmatpush2.msra.mxu0 0.0
    %152 = vmatprep.subr.mxu0 0.0
    %153 = vmatpush2.msra.mxu0 0.0
    %154 = vmatprep.subr.mxu0 0.0
    %155 = vmatpush2.msra.mxu0 0.0
    %156 = vmatprep.subr.mxu0 0.0
    %157 = vmatpush2.msra.mxu0 0.0
    %158 = vmatprep.subr.mxu0 0.0
    %159 = vmatpush2.msra.mxu0 0.0
    %160 = vmatprep.subr.mxu0 0.0
    %161 = vmatpush2.msra.mxu0 0.0
    %162 = vmatprep.subr.mxu0 0.0
    %163 = vmatpush2.msra.mxu0 0.0
    %164 = vmatprep.subr.mxu0 0.0
    %165 = vmatpush2.msra.mxu0 0.0
    %166 = vmatprep.subr.mxu0 0.0
    %167 = vmatpush2.msra.mxu0 0.0
    %168 = vmatprep.subr.mxu0 0.0
    %169 = vmatpush2.msra.mxu0 0.0
    %170 = vmatprep.subr.mxu0 0.0
    %171 = vmatpush2.msra.mxu0 0.0
    %172 = vmatprep.subr.mxu0 0.0
    %173 = vmatpush2.msra.mxu0 0.0
    %174 = vmatprep.subr.mxu0 0.0
    %175 = vmatpush2.msra.mxu0 0.0
    %176 = vmatprep.mubr.f32.mxu0 0.0
    %177 = vmatmul.mubr.f32.gmra.mxu0 %v85
    %v178 = vpop.f32.mrf.mxu0
    %v179 = vadd.f32 %v46, %v178
    %v180 = vpop.f32.mrf.mxu0
    %181 = vmatprep.mubr.f32.mxu0 0.0
    %182 = vmatmul.mubr.f32.gmra.mxu0 %v88
    %v183 = vpop.f32.mrf.mxu0
    %v184 = vadd.f32 %v51, %v183
    %v185 = vpop.f32.mrf.mxu0
    %186 = vmatprep.mubr.f32.mxu0 0.0
    %187 = vmatmul.mubr.f32.gmra.mxu0 %v91
    %v188 = vpop.f32.mrf.mxu0
    %v189 = vadd.f32 %v56, %v188
    %v190 = vpop.f32.mrf.mxu0
    %191 = vmatprep.mubr.f32.mxu0 0.0
    %192 = vmatmul.mubr.f32.gmra.mxu0 %v94
    %v193 = vpop.f32.mrf.mxu0
    %v194 = vadd.f32 %v61, %v193
    %v195 = vpop.f32.mrf.mxu0
    %196 = vmatprep.mubr.f32.mxu0 0.0
    %197 = vmatmul.mubr.f32.gmra.mxu0 %v97
    %v198 = vpop.f32.mrf.mxu0
    %v199 = vadd.f32 %v66, %v198
    %v200 = vpop.f32.mrf.mxu0
    %201 = vmatprep.mubr.f32.mxu0 0.0
    %202 = vmatmul.mubr.f32.gmra.mxu0 %v100
    %v203 = vpop.f32.mrf.mxu0
    %v204 = vadd.f32 %v71, %v203
    %v205 = vpop.f32.mrf.mxu0
    %206 = vmatprep.mubr.f32.mxu0 0.0
    %207 = vmatmul.mubr.f32.gmra.mxu0 %v103
    %v208 = vpop.f32.mrf.mxu0
    %v209 = vadd.f32 %v76, %v208
    %v210 = vpop.f32.mrf.mxu0
    %211 = vmatprep.mubr.f32.mxu0 0.0
    %212 = vmatmul.mubr.f32.gmra.mxu0 %v106
    %v213 = vpop.f32.mrf.mxu0
    %v214 = vadd.f32 %v81, %v213
    %v215 = vpop.f32.mrf.mxu0
    %216 = vdwg.mxu0
    %v217 = vtanh.pop %v179
    %v218 = vtanh.pop %v184
    %v219 = vtanh.pop %v189
    %v220 = vtanh.pop %v194
    %v221 = vtanh.pop %v199
    %v222 = vtanh.pop %v204
    %v223 = vtanh.pop %v209
    %v224 = vtanh.pop %v214
    %v226 = vrot.slane %v217, 4
    %v228 = vmax.f32 %v217, %v226
    %v230 = vrot.slane %v218, 4
    %v232 = vmax.f32 %v218, %v230
    %v234 = vrot.slane %v219, 4
    %v236 = vmax.f32 %v219, %v234
    %v238 = vrot.slane %v220, 4
    %v240 = vmax.f32 %v220, %v238
    %v242 = vrot.slane %v221, 4
    %v244 = vmax.f32 %v221, %v242
    %v246 = vrot.slane %v222, 4
    %v248 = vmax.f32 %v222, %v246
    %v250 = vrot.slane %v223, 4
    %v252 = vmax.f32 %v223, %v250
    %v254 = vrot.slane %v224, 4
    %v256 = vmax.f32 %v224, %v254
    %v258 = vrot.slane %v232, 4
    %v261 = vrot.slane %v240, 4
    %v264 = vrot.slane %v248, 4
    %v267 = vrot.slane %v256, 4
    %vm269 = vcmask 1043456
    %v270 = vsel %vm269, %v228, %v258
    %v271 = vsel %vm269, %v236, %v261
    %v272 = vsel %vm269, %v244, %v264
    %v273 = vsel %vm269, %v252, %v267
    %vm274 = vcmask 261120
    %275 = vst.msk [vmem:[#allocation2] sm:$0xff] %vm274, %v270
    %276 = vst.msk [vmem:[#allocation2 + $0x8] sm:$0xff] %vm274, %v271
    %277 = vst.msk [vmem:[#allocation2 + $0x10] sm:$0xff] %vm274, %v272
    %278 = vst.msk [vmem:[#allocation2 + $0x18] sm:$0xff] %vm274, %v273
    %v279 = vld [vmem:[%s3] sm:$0xff]
    %v280 = vld [vmem:[%s3 + $0x8] sm:$0xff]
    %v281 = vld [vmem:[%s4] sm:$0xff]
    %v282 = vld [vmem:[%s4 + $0x8] sm:$0xff]
    %284 = vset.pattern.permute.xlu0 0
    %285 = vperm.xlu0 %284, %v281
    %v286 = vpop.permute.xlu0 %285
    %289 = vset.pattern.permute.xlu0 0
    %290 = vperm.xlu0 %289, %v282
    %v291 = vpop.permute.xlu0 %290
    %v294 = vsel %vm274, %v279, 0
    %v297 = vsel %vm274, %v280, 0
    %299 = vmatprep.subr.mxu0 0.0
    %300 = vmatpush1.msra.mxu0 0.0
    %301 = vmatprep.subr.mxu0 0.0
    %302 = vmatpush1.msra.mxu0 0.0
    %303 = vmatprep.subr.mxu0 0.0
    %304 = vmatpush1.msra.mxu0 0.0
    %305 = vmatprep.subr.mxu0 0.0
    %306 = vmatpush1.msra.mxu0 0.0
    %307 = vmatprep.subr.mxu0 0.0
    %308 = vmatpush1.msra.mxu0 0.0
    %309 = vmatprep.subr.mxu0 0.0
    %310 = vmatpush1.msra.mxu0 0.0
    %311 = vmatprep.subr.mxu0 0.0
    %312 = vmatpush1.msra.mxu0 0.0
    %313 = vmatprep.subr.mxu0 0.0
    %314 = vmatpush1.msra.mxu0 0.0
    %315 = vmatprep.subr.mxu0 0.0
    %316 = vmatpush1.msra.mxu0 0.0
    %317 = vmatprep.subr.mxu0 0.0
    %318 = vmatpush1.msra.mxu0 0.0
    %319 = vmatprep.subr.mxu0 0.0
    %320 = vmatpush1.msra.mxu0 0.0
    %321 = vmatprep.subr.mxu0 0.0
    %322 = vmatpush1.msra.mxu0 0.0
    %323 = vmatprep.subr.mxu0 0.0
    %324 = vmatpush1.msra.mxu0 %v273
    %325 = vmatprep.subr.mxu0 0.0
    %326 = vmatpush1.msra.mxu0 %v272
    %327 = vmatprep.subr.mxu0 0.0
    %328 = vmatpush1.msra.mxu0 %v271
    %329 = vmatprep.subr.mxu0 0.0
    %330 = vmatpush1.msra.mxu0 %v270
    %331 = vmatprep.subr.mxu0 0.0
    %332 = vmatpush2.msra.mxu0 0.0
    %333 = vmatprep.subr.mxu0 0.0
    %334 = vmatpush2.msra.mxu0 0.0
    %335 = vmatprep.subr.mxu0 0.0
    %336 = vmatpush2.msra.mxu0 0.0
    %337 = vmatprep.subr.mxu0 0.0
    %338 = vmatpush2.msra.mxu0 0.0
    %339 = vmatprep.subr.mxu0 0.0
    %340 = vmatpush2.msra.mxu0 0.0
    %341 = vmatprep.subr.mxu0 0.0
    %342 = vmatpush2.msra.mxu0 0.0
    %343 = vmatprep.subr.mxu0 0.0
    %344 = vmatpush2.msra.mxu0 0.0
    %345 = vmatprep.subr.mxu0 0.0
    %346 = vmatpush2.msra.mxu0 0.0
    %347 = vmatprep.subr.mxu0 0.0
    %348 = vmatpush2.msra.mxu0 0.0
    %349 = vmatprep.subr.mxu0 0.0
    %350 = vmatpush2.msra.mxu0 0.0
    %351 = vmatprep.subr.mxu0 0.0
    %352 = vmatpush2.msra.mxu0 0.0
    %353 = vmatprep.subr.mxu0 0.0
    %354 = vmatpush2.msra.mxu0 0.0
    %355 = vmatprep.subr.mxu0 0.0
    %356 = vmatpush2.msra.mxu0 0.0
    %357 = vmatprep.subr.mxu0 0.0
    %358 = vmatpush2.msra.mxu0 0.0
    %359 = vmatprep.subr.mxu0 0.0
    %360 = vmatpush2.msra.mxu0 0.0
    %361 = vmatprep.subr.mxu0 0.0
    %362 = vmatpush2.msra.mxu0 0.0
    %363 = vmatprep.mubr.f32.mxu0 0.0
    %364 = vmatmul.mubr.f32.gmra.mxu0 %v294
    %v365 = vpop.f32.mrf.mxu0
    %v366 = vadd.f32 %v286, %v365
    %v367 = vpop.f32.mrf.mxu0
    %368 = vmatprep.mubr.f32.mxu0 0.0
    %369 = vmatmul.mubr.f32.gmra.mxu0 %v297
    %v370 = vpop.f32.mrf.mxu0
    %v371 = vadd.f32 %v291, %v370
    %v372 = vpop.f32.mrf.mxu0
    %373 = vdwg.mxu0
    %v374 = vtanh.pop %v366
    %v375 = vtanh.pop %v371
    %376 = vst.msk [vmem:[#allocation4] sm:$0xff] %vm274, %v374
    %377 = vst.msk [vmem:[#allocation4 + $0x8] sm:$0xff] %vm274, %v375
    // Predicated region
    $region22: #{tpu_custom_call.1} parent=1 // pred_check
      _
    $region23: #{tpu_custom_call.1} parent=1 // pred_check_branch
      %379 = sbr.rel (0) target = $region25
    $region24: #{tpu_custom_call.1} parent=1 // pred_region
      %s381 = ssub.s32 512, 512
      %382 = vsyncadd [#allocation3], %s381
      %s383 = sshll.u32 [#allocation2], 4
      %s384 = int_to_ptr.vmem [resolvable:$true] %s383
      %389 = dma.vmem_to_hbm [thread:$0]  %s384, 512, %s5, [#allocation3], 128, 128, 8
    $region25: #{tpu_custom_call.1} parent=1 // pred_fallthru
      _
    // Predicated region
    $region26: #{tpu_custom_call.1} parent=1 // pred_check
      _
    $region27: #{tpu_custom_call.1} parent=1 // pred_check_branch
      %391 = sbr.rel (0) target = $region29
    $region28: #{tpu_custom_call.1} parent=1 // pred_region
      %s393 = ssub.s32 256, 256
      %394 = vsyncadd [#allocation5], %s393
      %s395 = sshll.u32 [#allocation4], 4
      %s396 = int_to_ptr.vmem [resolvable:$true] %s395
      %401 = dma.vmem_to_hbm [thread:$0]  %s396, 256, %s6, [#allocation5], 128, 128, 8
    $region29: #{tpu_custom_call.1} parent=1 // pred_fallthru
      _
    // Predicated region
    $region30: #{tpu_custom_call.1} parent=1 // pred_check
      _
    $region31: #{tpu_custom_call.1} parent=1 // pred_check_branch
      %403 = sbr.rel (0) target = $region33
    $region32: #{tpu_custom_call.1} parent=1 // pred_region
      %404 = dma.done [#allocation3], 512
    $region33: #{tpu_custom_call.1} parent=1 // pred_fallthru
      _
    // Predicated region
    $region34: #{tpu_custom_call.1} parent=1 // pred_check
      _
    $region35: #{tpu_custom_call.1} parent=1 // pred_check_branch
      %406 = sbr.rel (0) target = $region37
    $region36: #{tpu_custom_call.1} parent=1 // pred_region
      %407 = dma.done [#allocation5], 256
    $region37: #{tpu_custom_call.1} parent=1 // pred_fallthru
      _
    %408 = vsyncpa [#allocation3], 1
    %409 = vsyncpa [#allocation5], 1

</llo_original>
